<compile_context>
chip_gen: v7x
topology: tpu7x:2x2x1
jax: 0.10.0
libtpu: 0.0.40
codegen_flags: <defaults>
</compile_context>

<pallas_src>
import jax
import jax.numpy as jnp
from jax.experimental import pallas as pl
from jax.experimental.pallas import tpu as pltpu


def _fused_kernel(embed_ref, wt_ref, b_ref, att_ref, out_ref,
                  acc_ref, m_ref, l_ref):
    """Grid over metapaths (reduction axis): online-softmax weighted sum."""
    i = pl.program_id(0)
    last = pl.num_programs(0) - 1

    x = embed_ref[0]                                               # [N, H]
    n_nodes = x.shape[0]
    inv_n = 1.0 / float(n_nodes)

    # score_i = att . mean_n tanh(x @ W.T + b)
    t = jnp.tanh(
        jnp.dot(x, wt_ref[...], preferred_element_type=jnp.float32)
        + b_ref[...]                                               # [1, H] bcast
    )                                                              # [N, H]
    z = t * att_ref[...]                                           # [N, H] (fold att pre-reduce)
    score = jnp.sum(z, axis=0, keepdims=True)                      # [1, H] sublane reduce
    score = jnp.sum(score, axis=1, keepdims=True) * inv_n          # [1, 1] lane reduce

    @pl.when(i == 0)
    def _():
        m_ref[...] = jnp.full_like(m_ref, -jnp.inf)
        l_ref[...] = jnp.zeros_like(l_ref)
        acc_ref[...] = jnp.zeros_like(acc_ref)

    m_prev = m_ref[...]                                            # [1, 1]
    l_prev = l_ref[...]                                            # [1, 1]
    m_new = jnp.maximum(m_prev, score)
    alpha = jnp.exp(m_prev - m_new)                                # rescale factor
    p = jnp.exp(score - m_new)                                     # unnormalized weight

    m_ref[...] = m_new
    l_ref[...] = alpha * l_prev + p
    acc_ref[...] = alpha * acc_ref[...] + p * x                    # f32 accumulator

    @pl.when(i == last)
    def _():
        out_ref[...] = (acc_ref[...] / l_ref[...]).astype(out_ref.dtype)


def semantics_attention(embeds, W, b, att):
    """embeds: [M, N, H] f32; W: [H, H]; b: [H]; att: [1, H] -> out: [N, H]."""
    M, N, H = embeds.shape
    wt = W.T                      # glue: fc(x) = x @ W.T + b
    b2d = b.reshape(1, H)

    out = pl.pallas_call(
        _fused_kernel,
        out_shape=jax.ShapeDtypeStruct((N, H), jnp.float32),
        grid=(M,),
        in_specs=[
            pl.BlockSpec((1, N, H), lambda i: (i, 0, 0)),          # E_i streamed per step
            pl.BlockSpec((H, H), lambda i: (0, 0)),                # W.T (resident)
            pl.BlockSpec((1, H), lambda i: (0, 0)),                # bias
            pl.BlockSpec((1, H), lambda i: (0, 0)),                # att
        ],
        out_specs=pl.BlockSpec((N, H), lambda i: (0, 0)),          # resident across grid
        scratch_shapes=[
            pltpu.VMEM((N, H), jnp.float32),                       # f32 accumulator
            pltpu.VMEM((1, 1), jnp.float32),                       # running max m
            pltpu.VMEM((1, 1), jnp.float32),                       # running denom l
        ],
        compiler_params=pltpu.CompilerParams(
            dimension_semantics=("arbitrary",),                    # metapath axis is a reduction
        ),
    )(embeds, wt, b2d, att)
    return out


def _reference(embeds, W, b, att):
    """Pure-JAX reference matching the PyTorch forward (attn_drop = identity)."""
    sp = jnp.tanh(jnp.einsum("mnh,kh->mnk", embeds, W) + b).mean(axis=1)  # [M, H]
    scores = jnp.einsum("h,mh->m", att[0], sp)                            # [M]
    beta = jax.nn.softmax(scores)
    return jnp.einsum("m,mnh->nh", beta, embeds)


if __name__ == "__main__":
    M, N, H = 3, 8, 32  # metapaths, nodes, hidden_dim

    key = jax.random.PRNGKey(0)
    k_w, k_b, k_att, k_x = jax.random.split(key, 4)

    gain = 1.414
    # xavier_normal_ for fc.weight [H, H]
    W = (gain * (2.0 / (H + H)) ** 0.5) * jax.random.normal(k_w, (H, H), jnp.float32)
    # default nn.Linear bias init: U(-1/sqrt(H), 1/sqrt(H))
    bound = 1.0 / (H ** 0.5)
    b = jax.random.uniform(k_b, (H,), jnp.float32, -bound, bound)
    # xavier_normal_ for att [1, H]
    att = (gain * (2.0 / (1 + H)) ** 0.5) * jax.random.normal(k_att, (1, H), jnp.float32)

    # list of M metapath embeddings stacked as [M, N, H]
    embeds = jax.random.normal(k_x, (M, N, H), jnp.float32)

    # TODO(synk): attn_drop > 0 (dropout on `att`) not implemented; identity used.
    out = semantics_attention(embeds, W, b, att)
    out = jax.block_until_ready(out)

    ref = _reference(embeds, W, b, att)
    assert out.shape == (N, H)
    assert jnp.allclose(out, ref, atol=1e-5, rtol=1e-5), "mismatch vs reference"
    print("KERNEL_OK")
</pallas_src>

<mosaic_0001>
module attributes {stable_mosaic.version = 11 : i64} {
  func.func @_fused_kernel(%arg0: i32, %arg1: memref<1x8x32xf32, #tpu.memory_space<vmem>>, %arg2: memref<32x32xf32, #tpu.memory_space<vmem>>, %arg3: memref<1x32xf32, #tpu.memory_space<vmem>>, %arg4: memref<1x32xf32, #tpu.memory_space<vmem>>, %arg5: memref<8x32xf32, #tpu.memory_space<vmem>>, %arg6: memref<8x32xf32, #tpu.memory_space<vmem>>, %arg7: memref<1x1xf32, #tpu.memory_space<vmem>>, %arg8: memref<1x1xf32, #tpu.memory_space<vmem>>) attributes {dimension_semantics = [#tpu.dimension_semantics<arbitrary>], iteration_bounds = array<i64: 3>, scalar_prefetch = 0 : i64, scratch_operands = 3 : i64, tpu.core_type = #tpu.core_type<tc>, window_params = [{transform_indices = @transform_0, window_bounds = array<i64: 1, 8, 32>}, {pipeline_mode = #tpu.pipeline_mode<synchronous>, transform_indices = @transform_1, window_bounds = array<i64: 32, 32>}, {pipeline_mode = #tpu.pipeline_mode<synchronous>, transform_indices = @transform_2, window_bounds = array<i64: 1, 32>}, {pipeline_mode = #tpu.pipeline_mode<synchronous>, transform_indices = @transform_3, window_bounds = array<i64: 1, 32>}, {pipeline_mode = #tpu.pipeline_mode<synchronous>, transform_indices = @transform_4, window_bounds = array<i64: 8, 32>}]} {
    %c0 = arith.constant 0 : index
    %c0_0 = arith.constant 0 : index
    %c0_1 = arith.constant 0 : index
    %0 = vector.load %arg1[%c0, %c0_0, %c0_1] : memref<1x8x32xf32, #tpu.memory_space<vmem>>, vector<1x8x32xf32>
    %1 = vector.shape_cast %0 : vector<1x8x32xf32> to vector<8x32xf32>
    %c0_2 = arith.constant 0 : index
    %c0_3 = arith.constant 0 : index
    %2 = vector.load %arg2[%c0_2, %c0_3] : memref<32x32xf32, #tpu.memory_space<vmem>>, vector<32x32xf32>
    %cst = arith.constant dense<0.000000e+00> : vector<8x32xf32>
    %3 = tpu.matmul %1, %2, %cst {dimension_numbers = #tpu.dot_dimension_numbers<[1], [0], [0], [1], [0, 0, 1, 1], [], []>} : vector<8x32xf32>, vector<32x32xf32>, vector<8x32xf32> -> vector<8x32xf32>
    %c0_4 = arith.constant 0 : index
    %c0_5 = arith.constant 0 : index
    %4 = vector.load %arg3[%c0_4, %c0_5] : memref<1x32xf32, #tpu.memory_space<vmem>>, vector<1x32xf32>
    %5 = vector.broadcast %4 : vector<1x32xf32> to vector<8x32xf32>
    %6 = arith.addf %3, %5 : vector<8x32xf32>
    %7 = math.tanh %6 : vector<8x32xf32>
    %c0_6 = arith.constant 0 : index
    %c0_7 = arith.constant 0 : index
    %8 = vector.load %arg4[%c0_6, %c0_7] : memref<1x32xf32, #tpu.memory_space<vmem>>, vector<1x32xf32>
    %9 = vector.broadcast %8 : vector<1x32xf32> to vector<8x32xf32>
    %10 = arith.mulf %7, %9 : vector<8x32xf32>
    %cst_8 = arith.constant dense<0.000000e+00> : vector<32xf32>
    %11 = vector.multi_reduction <add>, %10, %cst_8 [0] : vector<8x32xf32> to vector<32xf32>
    %12 = vector.shape_cast %11 : vector<32xf32> to vector<1x32xf32>
    %cst_9 = arith.constant dense<0.000000e+00> : vector<1xf32>
    %13 = vector.multi_reduction <add>, %12, %cst_9 [1] : vector<1x32xf32> to vector<1xf32>
    %14 = vector.shape_cast %13 : vector<1xf32> to vector<1x1xf32>
    %cst_10 = arith.constant 1.250000e-01 : f32
    %15 = vector.broadcast %cst_10 : f32 to vector<1x1xf32>
    %16 = arith.mulf %14, %15 : vector<1x1xf32>
    %c0_i32 = arith.constant 0 : i32
    %17 = arith.cmpi eq, %arg0, %c0_i32 : i32
    %18 = arith.extui %17 : i1 to i32
    %c0_i32_11 = arith.constant 0 : i32
    %19 = arith.cmpi ne, %18, %c0_i32_11 : i32
    scf.if %19 {
      %cst_25 = arith.constant 0xFF800000 : f32
      %41 = vector.broadcast %cst_25 : f32 to vector<1x1xf32>
      %c0_26 = arith.constant 0 : index
      %c0_27 = arith.constant 0 : index
      %42 = vector.load %arg7[%c0_26, %c0_27] : memref<1x1xf32, #tpu.memory_space<vmem>>, vector<1x1xf32>
      tpu.vector_store %arg7[%c0_26, %c0_27], %41 {strides = array<i32>} : memref<1x1xf32, #tpu.memory_space<vmem>>, vector<1x1xf32>,
      %cst_28 = arith.constant 0.000000e+00 : f32
      %43 = vector.broadcast %cst_28 : f32 to vector<1x1xf32>
      %c0_29 = arith.constant 0 : index
      %c0_30 = arith.constant 0 : index
      %44 = vector.load %arg8[%c0_29, %c0_30] : memref<1x1xf32, #tpu.memory_space<vmem>>, vector<1x1xf32>
      tpu.vector_store %arg8[%c0_29, %c0_30], %43 {strides = array<i32>} : memref<1x1xf32, #tpu.memory_space<vmem>>, vector<1x1xf32>,
      %cst_31 = arith.constant 0.000000e+00 : f32
      %45 = vector.broadcast %cst_31 : f32 to vector<8x32xf32>
      %c0_32 = arith.constant 0 : index
      %c0_33 = arith.constant 0 : index
      %46 = vector.load %arg6[%c0_32, %c0_33] : memref<8x32xf32, #tpu.memory_space<vmem>>, vector<8x32xf32>
      tpu.vector_store %arg6[%c0_32, %c0_33], %45 {strides = array<i32>} : memref<8x32xf32, #tpu.memory_space<vmem>>, vector<8x32xf32>,
    } else {
    }
    %c0_12 = arith.constant 0 : index
    %c0_13 = arith.constant 0 : index
    %20 = vector.load %arg7[%c0_12, %c0_13] : memref<1x1xf32, #tpu.memory_space<vmem>>, vector<1x1xf32>
    %c0_14 = arith.constant 0 : index
    %c0_15 = arith.constant 0 : index
    %21 = vector.load %arg8[%c0_14, %c0_15] : memref<1x1xf32, #tpu.memory_space<vmem>>, vector<1x1xf32>
    %22 = arith.maximumf %20, %16 : vector<1x1xf32>
    %23 = arith.subf %20, %22 : vector<1x1xf32>
    %24 = math.exp %23 : vector<1x1xf32>
    %25 = arith.subf %16, %22 : vector<1x1xf32>
    %26 = math.exp %25 : vector<1x1xf32>
    %c0_16 = arith.constant 0 : index
    %c0_17 = arith.constant 0 : index
    %27 = vector.load %arg7[%c0_16, %c0_17] : memref<1x1xf32, #tpu.memory_space<vmem>>, vector<1x1xf32>
    tpu.vector_store %arg7[%c0_16, %c0_17], %22 {strides = array<i32>} : memref<1x1xf32, #tpu.memory_space<vmem>>, vector<1x1xf32>,
    %28 = arith.mulf %24, %21 : vector<1x1xf32>
    %29 = arith.addf %28, %26 : vector<1x1xf32>
    %c0_18 = arith.constant 0 : index
    %c0_19 = arith.constant 0 : index
    %30 = vector.load %arg8[%c0_18, %c0_19] : memref<1x1xf32, #tpu.memory_space<vmem>>, vector<1x1xf32>
    tpu.vector_store %arg8[%c0_18, %c0_19], %29 {strides = array<i32>} : memref<1x1xf32, #tpu.memory_space<vmem>>, vector<1x1xf32>,
    %c0_20 = arith.constant 0 : index
    %c0_21 = arith.constant 0 : index
    %31 = vector.load %arg6[%c0_20, %c0_21] : memref<8x32xf32, #tpu.memory_space<vmem>>, vector<8x32xf32>
    %32 = vector.broadcast %24 : vector<1x1xf32> to vector<8x32xf32>
    %33 = arith.mulf %32, %31 : vector<8x32xf32>
    %34 = vector.broadcast %26 : vector<1x1xf32> to vector<8x32xf32>
    %35 = arith.mulf %34, %1 : vector<8x32xf32>
    %36 = arith.addf %33, %35 : vector<8x32xf32>
    %c0_22 = arith.constant 0 : index
    %c0_23 = arith.constant 0 : index
    %37 = vector.load %arg6[%c0_22, %c0_23] : memref<8x32xf32, #tpu.memory_space<vmem>>, vector<8x32xf32>
    tpu.vector_store %arg6[%c0_22, %c0_23], %36 {strides = array<i32>} : memref<8x32xf32, #tpu.memory_space<vmem>>, vector<8x32xf32>,
    %c2_i32 = arith.constant 2 : i32
    %38 = arith.cmpi eq, %arg0, %c2_i32 : i32
    %39 = arith.extui %38 : i1 to i32
    %c0_i32_24 = arith.constant 0 : i32
    %40 = arith.cmpi ne, %39, %c0_i32_24 : i32
    scf.if %40 {
      %c0_25 = arith.constant 0 : index
      %c0_26 = arith.constant 0 : index
      %41 = vector.load %arg6[%c0_25, %c0_26] : memref<8x32xf32, #tpu.memory_space<vmem>>, vector<8x32xf32>
      %c0_27 = arith.constant 0 : index
      %c0_28 = arith.constant 0 : index
      %42 = vector.load %arg8[%c0_27, %c0_28] : memref<1x1xf32, #tpu.memory_space<vmem>>, vector<1x1xf32>
      %43 = vector.broadcast %42 : vector<1x1xf32> to vector<8x32xf32>
      %44 = arith.divf %41, %43 : vector<8x32xf32>
      %c0_29 = arith.constant 0 : index
      %c0_30 = arith.constant 0 : index
      %45 = vector.load %arg5[%c0_29, %c0_30] : memref<8x32xf32, #tpu.memory_space<vmem>>, vector<8x32xf32>
      tpu.vector_store %arg5[%c0_29, %c0_30], %44 {strides = array<i32>} : memref<8x32xf32, #tpu.memory_space<vmem>>, vector<8x32xf32>,
    } else {
    }
    return
  }
  func.func @transform_0(%arg0: i32) -> (i32, i32, i32) {
    %c0_i32 = arith.constant 0 : i32
    %c0_i32_0 = arith.constant 0 : i32
    %c0_i32_1 = arith.constant 0 : i32
    return %arg0, %c0_i32, %c0_i32_0 : i32, i32, i32
  }
  func.func @transform_1(%arg0: i32) -> (i32, i32) {
    %c0_i32 = arith.constant 0 : i32
    %c0_i32_0 = arith.constant 0 : i32
    %c0_i32_1 = arith.constant 0 : i32
    return %c0_i32, %c0_i32_0 : i32, i32
  }
  func.func @transform_2(%arg0: i32) -> (i32, i32) {
    %c0_i32 = arith.constant 0 : i32
    %c0_i32_0 = arith.constant 0 : i32
    %c0_i32_1 = arith.constant 0 : i32
    return %c0_i32, %c0_i32_0 : i32, i32
  }
  func.func @transform_3(%arg0: i32) -> (i32, i32) {
    %c0_i32 = arith.constant 0 : i32
    %c0_i32_0 = arith.constant 0 : i32
    %c0_i32_1 = arith.constant 0 : i32
    return %c0_i32, %c0_i32_0 : i32, i32
  }
  func.func @transform_4(%arg0: i32) -> (i32, i32) {
    %c0_i32 = arith.constant 0 : i32
    %c0_i32_0 = arith.constant 0 : i32
    %c0_i32_1 = arith.constant 0 : i32
    return %c0_i32, %c0_i32_0 : i32, i32
  }
}

</mosaic_0001>

<llo_original>
// kernel: tpu_custom_call.1
$region0: #{tpu_custom_call.1}
  #allocation0 [shape = 'u32[]', space=smem, size = 0x4, offset = 0x4, fixed_abs, tag = 'smem constant byte address 0x4 - core index']
  #allocation1 [shape = 'u32[144,128]{1,0:T(1,128)}', space=vmem, size = 0x12000, scoped, tag = 'internal scratch']
  #allocation2 [shape = 'f32[8,32]{1,0:T(8,128)}', space=vmem, size = 0x1000, scoped, tag = 'scratch operand']
  #allocation3 [shape = 'f32[1,1]{1,0:T(1,128)}', space=vmem, size = 0x200, scoped, tag = 'scratch operand']
  #allocation4 [shape = 'f32[1,1]{1,0:T(1,128)}', space=vmem, size = 0x200, scoped, tag = 'scratch operand']
  %s0 = inlined_call_operand.hbm [shape: f32[3,8,32], index: 0, kind: input, shape index: {}]
  %s1 = inlined_call_operand.hbm [shape: f32[32,32], index: 1, kind: input, shape index: {}]
  %s2 = inlined_call_operand.vmem [shape: f32[1,32], index: 2, kind: input, shape index: {}]
  %s3 = inlined_call_operand.vmem [shape: f32[1,32], index: 3, kind: input, shape index: {}]
  %s4 = inlined_call_operand.hbm [shape: f32[8,32], index: 4, kind: output, shape index: {}]
  %s5 = sld [smem:[#allocation0]]
  $region65: #{tpu_custom_call.1} parent=0
    _
  %s7 = ssub.s32 1, %s5
  %s8 = scalar_select 0, %s7, %s5
  $region1: #{tpu_custom_call.1} parent=0
    #allocation5 [shape = 'u8[8192]{0}', space=vmem, size = 0x2000, scoped, tag = 'input window, operand 0']
    #allocation6 [shape = 's32[2]{0}', space=sflag, size = 0x8, scoped, tag = 'scoped memory for tpu_custom_call.1']
    #allocation7 [shape = 's32[2]{0}', space=sflag, size = 0x8, scoped, tag = 'scoped memory for tpu_custom_call.1']
    #allocation8 [shape = 'u8[16384]{0}', space=vmem, size = 0x4000, scoped, tag = 'input window, operand 1, single buffered']
    #allocation9 [shape = 's32[1]{0}', space=sflag, size = 0x4, scoped, tag = 'scoped memory for tpu_custom_call.1']
    #allocation10 [shape = 'u8[4096]{0}', space=vmem, size = 0x1000, scoped, tag = 'output window, operand 0, single buffered']
    %9 = vsyncpa [#allocation6], 0
    %s10 = scalar_lea.sflag [#allocation6], 1
    %11 = vsyncpa %s10, 0
    %12 = vsyncpa [#allocation9], 0
    %13 = vsyncpa [#allocation7], 0
    loop: start=0, step=1, limit=5
    $region2: #{tpu_custom_call.1} parent=1 // loop_pre_header
      _
    $region3: #{tpu_custom_call.1} parent=1 // loop_header
      %s15 = sphi 0, %s19
      %p16 = scmp.ge.s32.totalorder %s15, 5
      %s25 = sphi 0, %s27
      %s28 = sphi 0, %s25
      %s29 = sphi 0, %s28
      %s45 = sphi 0, %s29
      %s49 = sphi 0, %s49
      %s51 = sphi 0, %s49
      %s52 = sphi 0, %s51
      %s66 = sphi 0, %s52
      %s70 = sphi 0, %s70
      %s72 = sphi 0, %s70
      %s73 = sphi 0, %s72
      %s87 = sphi 0, %s73
      %s91 = sphi 0, %s91
      %s93 = sphi 0, %s91
      %s94 = sphi 0, %s93
      %s108 = sphi 0, %s94
      %s112 = sphi 0, %s112
      %s114 = sphi 0, %s112
      %s115 = sphi 0, %s114
      %s129 = sphi 0, %s115
    $region4: #{tpu_custom_call.1} parent=1 // loop_header_branch
      %18 = sbr.rel (%p16) target = $region8
    $region5: #{tpu_custom_call.1} parent=1 // loop_body
      %s20 = ssub.s32 %s15, 1
      %s21 = ssub.s32 %s15, 2
      %s22 = sadd.s32 %s15, 1
      %s23 = ssub.s32 %s15, %s22
      %p24 = scmp.eq.s32.totalorder %s23, 0
      %s26 = sadd.s32 %s25, 1
      %s27 = scalar_select %p24, %s25, %s26
      %p30 = pneg %p24
      %p31 = scmp.eq.s32.totalorder %s15, 2
      %p32 = por %p30, %p31
      %p33 = scmp.ne.s32.totalorder %s25, %s28
      %p34 = scmp.eq.s32.totalorder %s15, 0
      %p35 = por %p33, %p34
      %p36 = scmp.ne.s32.totalorder %s25, %s28
      %p37 = scmp.eq.s32.totalorder %s20, 2
      %p38 = por %p36, %p37
      %p39 = scmp.ne.s32.totalorder %s28, %s29
      %p40 = scmp.eq.s32.totalorder %s20, 0
      %p41 = por %p39, %p40
      %p42 = scmp.ne.s32.totalorder %s28, %s29
      %p43 = scmp.eq.s32.totalorder %s21, 2
      %p44 = por %p42, %p43
      %p46 = scmp.ne.s32.totalorder %s29, %s45
      %p47 = scmp.eq.s32.totalorder %s21, 0
      %p48 = por %p46, %p47
      %s50 = sadd.s32 %s49, 1
      %p53 = scmp.eq.s32.totalorder %s15, 2
      %p54 = scmp.ne.s32.totalorder %s49, %s51
      %p55 = scmp.eq.s32.totalorder %s15, 0
      %p56 = por %p54, %p55
      %p57 = scmp.ne.s32.totalorder %s49, %s51
      %p58 = scmp.eq.s32.totalorder %s20, 2
      %p59 = por %p57, %p58
      %p60 = scmp.ne.s32.totalorder %s51, %s52
      %p61 = scmp.eq.s32.totalorder %s20, 0
      %p62 = por %p60, %p61
      %p63 = scmp.ne.s32.totalorder %s51, %s52
      %p64 = scmp.eq.s32.totalorder %s21, 2
      %p65 = por %p63, %p64
      %p67 = scmp.ne.s32.totalorder %s52, %s66
      %p68 = scmp.eq.s32.totalorder %s21, 0
      %p69 = por %p67, %p68
      %s71 = sadd.s32 %s70, 1
      %p74 = scmp.eq.s32.totalorder %s15, 2
      %p75 = scmp.ne.s32.totalorder %s70, %s72
      %p76 = scmp.eq.s32.totalorder %s15, 0
      %p77 = por %p75, %p76
      %p78 = scmp.ne.s32.totalorder %s70, %s72
      %p79 = scmp.eq.s32.totalorder %s20, 2
      %p80 = por %p78, %p79
      %p81 = scmp.ne.s32.totalorder %s72, %s73
      %p82 = scmp.eq.s32.totalorder %s20, 0
      %p83 = por %p81, %p82
      %p84 = scmp.ne.s32.totalorder %s72, %s73
      %p85 = scmp.eq.s32.totalorder %s21, 2
      %p86 = por %p84, %p85
      %p88 = scmp.ne.s32.totalorder %s73, %s87
      %p89 = scmp.eq.s32.totalorder %s21, 0
      %p90 = por %p88, %p89
      %s92 = sadd.s32 %s91, 1
      %p95 = scmp.eq.s32.totalorder %s15, 2
      %p96 = scmp.ne.s32.totalorder %s91, %s93
      %p97 = scmp.eq.s32.totalorder %s15, 0
      %p98 = por %p96, %p97
      %p99 = scmp.ne.s32.totalorder %s91, %s93
      %p100 = scmp.eq.s32.totalorder %s20, 2
      %p101 = por %p99, %p100
      %p102 = scmp.ne.s32.totalorder %s93, %s94
      %p103 = scmp.eq.s32.totalorder %s20, 0
      %p104 = por %p102, %p103
      %p105 = scmp.ne.s32.totalorder %s93, %s94
      %p106 = scmp.eq.s32.totalorder %s21, 2
      %p107 = por %p105, %p106
      %p109 = scmp.ne.s32.totalorder %s94, %s108
      %p110 = scmp.eq.s32.totalorder %s21, 0
      %p111 = por %p109, %p110
      %s113 = sadd.s32 %s112, 1
      %p116 = scmp.eq.s32.totalorder %s15, 2
      %p117 = scmp.ne.s32.totalorder %s112, %s114
      %p118 = scmp.eq.s32.totalorder %s15, 0
      %p119 = por %p117, %p118
      %p120 = scmp.ne.s32.totalorder %s112, %s114
      %p121 = scmp.eq.s32.totalorder %s20, 2
      %p122 = por %p120, %p121
      %p123 = scmp.ne.s32.totalorder %s114, %s115
      %p124 = scmp.eq.s32.totalorder %s20, 0
      %p125 = por %p123, %p124
      %p126 = scmp.ne.s32.totalorder %s114, %s115
      %p127 = scmp.eq.s32.totalorder %s21, 2
      %p128 = por %p126, %p127
      %p130 = scmp.ne.s32.totalorder %s115, %s129
      %p131 = scmp.eq.s32.totalorder %s21, 0
      %p132 = por %p130, %p131
      %p133 = scmp.le.s32.totalorder 1, %s15
      %p134 = scmp.lt.s32.totalorder %s15, 4
      %p135 = pnand %p133, %p134
      %p136 = pneg %p135
      // Predicated region
      $region9: #{tpu_custom_call.1} parent=5 // pred_check
        _
      $region10: #{tpu_custom_call.1} parent=5 // pred_check_branch
        %138 = sbr.rel (%p135) target = $region12
      $region11: #{tpu_custom_call.1} parent=5 // pred_region
        %s139 = ssub.s32 %s15, 1
        // Predicated region
        $region13: #{tpu_custom_call.1} parent=11 // pred_check
          %p140 = pneg %p62
        $region14: #{tpu_custom_call.1} parent=11 // pred_check_branch
          %142 = sbr.rel (%p140) target = $region16
        $region15: #{tpu_custom_call.1} parent=11 // pred_region
          %s144 = ssub.s32 512, 512
          %145 = vsyncadd [#allocation9], %s144
          %s146 = sshll.u32 [#allocation8], 4
          %s147 = int_to_ptr.vmem [resolvable:$true] %s146
          %152 = dma.hbm_to_vmem [thread:$0]  %s1, 512, %s147, [#allocation9], 128, 128, 8
        $region16: #{tpu_custom_call.1} parent=11 // pred_fallthru
          _
        // Predicated region
        $region17: #{tpu_custom_call.1} parent=11 // pred_check
          %p153 = pneg %p83
        $region18: #{tpu_custom_call.1} parent=11 // pred_check_branch
          %155 = sbr.rel (%p153) target = $region20
        $region19: #{tpu_custom_call.1} parent=11 // pred_region
          _
        $region20: #{tpu_custom_call.1} parent=11 // pred_fallthru
          _
        // Predicated region
        $region21: #{tpu_custom_call.1} parent=11 // pred_check
          %p156 = pneg %p104
        $region22: #{tpu_custom_call.1} parent=11 // pred_check_branch
          %158 = sbr.rel (%p156) target = $region24
        $region23: #{tpu_custom_call.1} parent=11 // pred_region
          _
        $region24: #{tpu_custom_call.1} parent=11 // pred_fallthru
          _
      $region12: #{tpu_custom_call.1} parent=5 // pred_fallthru
        _
      %p159 = scmp.lt.s32.totalorder %s15, 3
      // Predicated region
      $region25: #{tpu_custom_call.1} parent=5 // pred_check
        %p160 = pneg %p159
      $region26: #{tpu_custom_call.1} parent=5 // pred_check_branch
        %162 = sbr.rel (%p160) target = $region28
      $region27: #{tpu_custom_call.1} parent=5 // pred_region
        // Predicated region
        $region29: #{tpu_custom_call.1} parent=27 // pred_check
          %p163 = pneg %p35
        $region30: #{tpu_custom_call.1} parent=27 // pred_check_branch
          %165 = sbr.rel (%p163) target = $region32
        $region31: #{tpu_custom_call.1} parent=27 // pred_region
          %s166 = sand.u32 %s25, 1
          %s167 = scalar_lea.sflag [#allocation6], %s166
          %s168 = sand.u32 %s25, 1
          %s169 = smul.addr %s168, 8
          %s170 = scalar_lea.vmem [#allocation5], %s169
          %s172 = ssub.s32 128, 128
          %173 = vsyncadd %s167, %s172
          %s174 = smul.addr %s15, 128
          %s175 = scalar_lea.hbm %s0, %s174
          %s177 = sshll.u32 %s170, 4
          %s178 = int_to_ptr.vmem [resolvable:$true] %s177
          %180 = dma.hbm_to_vmem [thread:$0]  %s175, 128, %s178, %s167
        $region32: #{tpu_custom_call.1} parent=27 // pred_fallthru
          _
      $region28: #{tpu_custom_call.1} parent=5 // pred_fallthru
        _
      %p181 = scmp.le.s32.totalorder 1, %s15
      %p182 = scmp.lt.s32.totalorder %s15, 4
      %p183 = pnand %p181, %p182
      %p184 = pneg %p183
      // Predicated region
      $region33: #{tpu_custom_call.1} parent=5 // pred_check
        _
      $region34: #{tpu_custom_call.1} parent=5 // pred_check_branch
        %186 = sbr.rel (%p183) target = $region36
      $region35: #{tpu_custom_call.1} parent=5 // pred_region
        %s187 = ssub.s32 %s15, 1
        %s188 = sand.u32 %s28, 1
        %s189 = scalar_lea.sflag [#allocation6], %s188
        %s190 = sand.u32 %s28, 1
        %s191 = smul.addr %s190, 8
        %s192 = scalar_lea.vmem [#allocation5], %s191
        // Predicated region
        $region37: #{tpu_custom_call.1} parent=35 // pred_check
          %p193 = pneg %p41
        $region38: #{tpu_custom_call.1} parent=35 // pred_check_branch
          %195 = sbr.rel (%p193) target = $region40
        $region39: #{tpu_custom_call.1} parent=35 // pred_region
          %196 = dma.done %s189, 128
        $region40: #{tpu_custom_call.1} parent=35 // pred_fallthru
          _
        // Predicated region
        $region41: #{tpu_custom_call.1} parent=35 // pred_check
          %p197 = pneg %p62
        $region42: #{tpu_custom_call.1} parent=35 // pred_check_branch
          %199 = sbr.rel (%p197) target = $region44
        $region43: #{tpu_custom_call.1} parent=35 // pred_region
          %200 = dma.done [#allocation9], 512
        $region44: #{tpu_custom_call.1} parent=35 // pred_fallthru
          _
        %s201 = sand.u32 %s28, 1
        %s202 = scalar_lea.sflag [#allocation6], %s201
        %s203 = sand.u32 %s28, 1
        %s204 = smul.addr %s203, 8
        %s205 = scalar_lea.vmem [#allocation5], %s204
        %p206 = pneg %p41
        %p207 = pneg %p38
        %p208 = pneg %p62
        %p209 = pneg %p59
        %p210 = pneg %p83
        %p211 = pneg %p80
        %p212 = pneg %p104
        %p213 = pneg %p101
        %p214 = pneg %p125
        %p215 = pneg %p122
        %v216 = vld [vmem:[%s192] sm:$0xff]
        %v217 = vld [vmem:[#allocation8] sm:$0xff]
        %v218 = vld [vmem:[#allocation8 + $0x8] sm:$0xff]
        %v219 = vld [vmem:[#allocation8 + $0x10] sm:$0xff]
        %v220 = vld [vmem:[#allocation8 + $0x18] sm:$0xff]
        %v221 = vld [vmem:[%s2] sm:$0x1]
        %v223 = vlaneseq
        %v224 = vshrl.u32 %v223, 7
        %v225 = vsub.s32 0, %v224
        %v226 = vrot.slane %v221, %v225
        %vm228 = vcmask 261120
        %v230 = vsel %vm228, %v216, 0
        %232 = vmatprep.subr.mxu0 0.0
        %233 = vmatpush1.msra.mxu0 %v217
        %234 = vmatprep.subr.mxu0 0.0
        %235 = vmatpush1.msra.mxu0 %v218
        %236 = vmatprep.subr.mxu0 0.0
        %237 = vmatpush1.msra.mxu0 %v219
        %238 = vmatprep.subr.mxu0 0.0
        %239 = vmatpush1.msra.mxu0 %v220
        %240 = vmatprep.subr.mxu0 0.0
        %241 = vmatpush1.msra.mxu0 0.0
        %242 = vmatprep.subr.mxu0 0.0
        %243 = vmatpush1.msra.mxu0 0.0
        %244 = vmatprep.subr.mxu0 0.0
        %245 = vmatpush1.msra.mxu0 0.0
        %246 = vmatprep.subr.mxu0 0.0
        %247 = vmatpush1.msra.mxu0 0.0
        %248 = vmatprep.subr.mxu0 0.0
        %249 = vmatpush1.msra.mxu0 0.0
        %250 = vmatprep.subr.mxu0 0.0
        %251 = vmatpush1.msra.mxu0 0.0
        %252 = vmatprep.subr.mxu0 0.0
        %253 = vmatpush1.msra.mxu0 0.0
        %254 = vmatprep.subr.mxu0 0.0
        %255 = vmatpush1.msra.mxu0 0.0
        %256 = vmatprep.subr.mxu0 0.0
        %257 = vmatpush1.msra.mxu0 0.0
        %258 = vmatprep.subr.mxu0 0.0
        %259 = vmatpush1.msra.mxu0 0.0
        %260 = vmatprep.subr.mxu0 0.0
        %261 = vmatpush1.msra.mxu0 0.0
        %262 = vmatprep.subr.mxu0 0.0
        %263 = vmatpush1.msra.mxu0 0.0
        %264 = vmatprep.subr.mxu0 0.0
        %265 = vmatpush1.msra.mxu0 0.0
        %266 = vmatprep.subr.mxu0 0.0
        %267 = vmatpush1.msra.mxu0 0.0
        %268 = vmatprep.subr.mxu0 0.0
        %269 = vmatpush1.msra.mxu0 0.0
        %270 = vmatprep.subr.mxu0 0.0
        %271 = vmatpush1.msra.mxu0 0.0
        %272 = vmatprep.subr.mxu0 0.0
        %273 = vmatpush1.msra.mxu0 0.0
        %274 = vmatprep.subr.mxu0 0.0
        %275 = vmatpush1.msra.mxu0 0.0
        %276 = vmatprep.subr.mxu0 0.0
        %277 = vmatpush1.msra.mxu0 0.0
        %278 = vmatprep.subr.mxu0 0.0
        %279 = vmatpush1.msra.mxu0 0.0
        %280 = vmatprep.subr.mxu0 0.0
        %281 = vmatpush1.msra.mxu0 0.0
        %282 = vmatprep.subr.mxu0 0.0
        %283 = vmatpush1.msra.mxu0 0.0
        %284 = vmatprep.subr.mxu0 0.0
        %285 = vmatpush1.msra.mxu0 0.0
        %286 = vmatprep.subr.mxu0 0.0
        %287 = vmatpush1.msra.mxu0 0.0
        %288 = vmatprep.subr.mxu0 0.0
        %289 = vmatpush1.msra.mxu0 0.0
        %290 = vmatprep.subr.mxu0 0.0
        %291 = vmatpush1.msra.mxu0 0.0
        %292 = vmatprep.subr.mxu0 0.0
        %293 = vmatpush1.msra.mxu0 0.0
        %294 = vmatprep.subr.mxu0 0.0
        %295 = vmatpush1.msra.mxu0 0.0
        %296 = vmatprep.mubr.f32.mxu0 0.0
        %297 = vmatmul.mubr.f32.gmra.mrb[0].mxu0 %v230
        %v298 = vpop.f32.mrb[0].mxu0
        %v299 = vadd.f32 %v226, %v298
        %v300 = vpop.f32.mrb[0].mxu0
        %301 = vdwg.mxu0
        %v302 = vtanh.pop %v299
        %v303 = vld [vmem:[%s3] sm:$0x1]
        %v305 = vlaneseq
        %v306 = vshrl.u32 %v305, 7
        %v307 = vsub.s32 0, %v306
        %v308 = vrot.slane %v303, %v307
        %v310 = vmul.f32 %v302, %v308
        %v311 = vsel %vm228, %v310, 0.0
        %v312 = vrot.slane %v311, 4
        %v313 = vadd.f32 %v311, %v312
        %v314 = vrot.slane %v313, 2
        %v315 = vadd.f32 %v313, %v314
        %v316 = vrot.slane %v315, 1
        %v317 = vadd.f32 %v315, %v316
        %v318 = vsel %vm228, %v317, 0.0
        %319 = vadd.xlane.f32.xlu0 %v318
        %v320 = vpop.xlane.xlu0 %319
        %v321 = vmul.f32 %v320, 0.125
        %p322 = scmp.eq.s32.totalorder %s20, 0
        // Predicated region
        $region45: #{tpu_custom_call.1} parent=35 // pred_check
          %p323 = pneg %p322
        $region46: #{tpu_custom_call.1} parent=35 // pred_check_branch
          %325 = sbr.rel (%p323) target = $region48
        $region47: #{tpu_custom_call.1} parent=35 // pred_region
          %vm326 = vcmask 0
          %327 = vst.msk [vmem:[#allocation3] sm:$0x1] %vm326, -inf
          %328 = vst.msk [vmem:[#allocation4] sm:$0x1] %vm326, 0.0
          %329 = vst.msk [vmem:[#allocation2] sm:$0xff] %vm228, 0.0
        $region48: #{tpu_custom_call.1} parent=35 // pred_fallthru
          _
        %v330 = vld [vmem:[#allocation3] sm:$0x1]
        %v331 = vld [vmem:[#allocation4] sm:$0x1]
        %v332 = vmax.f32 %v330, %v321
        %v333 = vsub.f32 %v330, %v332
        %v334 = vmul.f32 %v333, 1.442695
        %v335 = vpow.pop %v334
        %v336 = vsub.f32 %v321, %v332
        %v337 = vmul.f32 %v336, 1.442695
        %v338 = vpow.pop %v337
        %vm339 = vcmask 0
        %340 = vst.msk [vmem:[#allocation3] sm:$0x1] %vm339, %v332
        %v341 = vmul.f32 %v335, %v331
        %v342 = vadd.f32 %v341, %v338
        %343 = vst.msk [vmem:[#allocation4] sm:$0x1] %vm339, %v342
        %v344 = vld [vmem:[#allocation2] sm:$0xff]
        %v346 = vlaneseq
        %v347 = vshrl.u32 %v346, 7
        %v348 = vsub.s32 0, %v347
        %v349 = vrot.slane %v335, %v348
        %350 = vset.pattern.permute.xlu0 0
        %351 = vperm.xlu0 %350, %v349
        %v352 = vpop.permute.xlu0 %351
        %v354 = vmul.f32 %v352, %v344
        %v356 = vlaneseq
        %v357 = vshrl.u32 %v356, 7
        %v358 = vsub.s32 0, %v357
        %v359 = vrot.slane %v338, %v358
        %360 = vset.pattern.permute.xlu0 0
        %361 = vperm.xlu0 %360, %v359
        %v362 = vpop.permute.xlu0 %361
        %v364 = vmul.f32 %v362, %v216
        %v365 = vadd.f32 %v354, %v364
        %366 = vst.msk [vmem:[#allocation2] sm:$0xff] %vm228, %v365
        %p367 = scmp.eq.s32.totalorder %s20, 2
        // Predicated region
        $region49: #{tpu_custom_call.1} parent=35 // pred_check
          %p368 = pneg %p367
        $region50: #{tpu_custom_call.1} parent=35 // pred_check_branch
          %370 = sbr.rel (%p368) target = $region52
        $region51: #{tpu_custom_call.1} parent=35 // pred_region
          %v371 = vld [vmem:[#allocation2] sm:$0xff]
          %v372 = vld [vmem:[#allocation4] sm:$0x1]
          %v374 = vlaneseq
          %v375 = vshrl.u32 %v374, 7
          %v376 = vsub.s32 0, %v375
          %v377 = vrot.slane %v372, %v376
          %378 = vset.pattern.permute.xlu0 0
          %379 = vperm.xlu0 %378, %v377
          %v380 = vpop.permute.xlu0 %379
          %v382 = vrcp.pop %v380
          %v383 = vmul.f32 %v371, %v382
          %384 = vst.msk [vmem:[#allocation10] sm:$0xff] %vm228, %v383
        $region52: #{tpu_custom_call.1} parent=35 // pred_fallthru
          _
        // Predicated region
        $region53: #{tpu_custom_call.1} parent=35 // pred_check
          %p385 = pneg %p122
        $region54: #{tpu_custom_call.1} parent=35 // pred_check_branch
          %387 = sbr.rel (%p385) target = $region56
        $region55: #{tpu_custom_call.1} parent=35 // pred_region
          %s389 = ssub.s32 128, 128
          %390 = vsyncadd [#allocation7], %s389
          %s392 = sshll.u32 [#allocation10], 4
          %s393 = int_to_ptr.vmem [resolvable:$true] %s392
          %395 = dma.vmem_to_hbm [thread:$0]  %s393, 128, %s4, [#allocation7]
        $region56: #{tpu_custom_call.1} parent=35 // pred_fallthru
          _
        // Predicated region
        $region57: #{tpu_custom_call.1} parent=35 // pred_check
          %p396 = pneg %p122
        $region58: #{tpu_custom_call.1} parent=35 // pred_check_branch
          %398 = sbr.rel (%p396) target = $region60
        $region59: #{tpu_custom_call.1} parent=35 // pred_region
          %399 = dma.done [#allocation7], 128
        $region60: #{tpu_custom_call.1} parent=35 // pred_fallthru
          _
      $region36: #{tpu_custom_call.1} parent=5 // pred_fallthru
        _
      %p400 = scmp.le.s32.totalorder 2, %s15
      // Predicated region
      $region61: #{tpu_custom_call.1} parent=5 // pred_check
        %p401 = pneg %p400
      $region62: #{tpu_custom_call.1} parent=5 // pred_check_branch
        %403 = sbr.rel (%p401) target = $region64
      $region63: #{tpu_custom_call.1} parent=5 // pred_region
        %s404 = ssub.s32 %s15, 2
      $region64: #{tpu_custom_call.1} parent=5 // pred_fallthru
        _
    $region6: #{tpu_custom_call.1} parent=1 // loop_footer
      %s19 = sadd.s32 1, %s15
    $region7: #{tpu_custom_call.1} parent=1 // loop_footer_branch
      %14 = sbr.rel target = $region3
    $region8: #{tpu_custom_call.1} parent=1 // loop_exit
      _
    %405 = vsyncpa [#allocation6], 1
    %s406 = scalar_lea.sflag [#allocation6], 1
    %407 = vsyncpa %s406, 1
    %408 = vsyncpa [#allocation9], 1
    %409 = vsyncpa [#allocation7], 1
    %s410 = scalar_lea.sflag [#allocation7], 1
    %411 = vsyncpa %s410, 1

</llo_original>
